<compile_context>
chip_gen: v7x
topology: tpu7x:2x2x1
jax: 0.10.0
libtpu: 0.0.40
codegen_flags: <defaults>
</compile_context>

<pallas_src>
import jax
import jax.numpy as jnp
from jax.experimental import pallas as pl
from jax.experimental.pallas import tpu as pltpu


def _rng_kernel(seed_ref, mu_ref, logsigma_ref, out_ref):
    """out = mu + exp(logsigma) * N(0,1), noise generated on-chip."""
    # Independent, deterministic stream per grid step.
    pltpu.prng_seed(seed_ref[0] + pl.program_id(0))
    noise = pltpu.stateful_normal(out_ref.shape, jnp.float32)
    mu = mu_ref[...].astype(jnp.float32)                      # (1, F) -> broadcasts
    sigma = jnp.exp(logsigma_ref[...].astype(jnp.float32))    # tiny (1, F) EUP op
    out_ref[...] = (mu + sigma * noise).astype(out_ref.dtype)


def _noise_kernel(mu_ref, logsigma_ref, noise_ref, out_ref):
    """Fallback path: noise supplied as an HBM operand."""
    mu = mu_ref[...].astype(jnp.float32)
    sigma = jnp.exp(logsigma_ref[...].astype(jnp.float32))
    out_ref[...] = (mu + sigma * noise_ref[...].astype(jnp.float32)).astype(out_ref.dtype)


def _block_rows(batch, feat, budget_bytes=4 * 1024 * 1024):
    """Batch rows per grid step: as many as fit a ~4 MiB f32 output block."""
    rows = max(8, budget_bytes // max(feat * 4, 1))
    if rows >= batch:
        return batch                    # single block == full dim -> always legal
    return max(8, (rows // 8) * 8)      # tiled: keep sublane count a multiple of 8


_COMPILER_PARAMS = pltpu.CompilerParams(
    dimension_semantics=("parallel",),          # batch steps are independent
    vmem_limit_bytes=32 * 1024 * 1024,          # explicit; safe on v5e/v6e/v7x
)


def _call_internal_rng(mu2d, logsigma2d, batch_size, seed, out_dtype, tb):
    feat = mu2d.shape[-1]
    grid = (pl.cdiv(batch_size, tb),)
    # index_maps receive the scalar-prefetch ref as trailing positional arg.
    param_spec = pl.BlockSpec((1, feat), lambda b, s: (0, 0))   # constant block
    out_spec = pl.BlockSpec((tb, feat), lambda b, s: (b, 0))
    return pl.pallas_call(
        _rng_kernel,
        out_shape=jax.ShapeDtypeStruct((batch_size, feat), out_dtype),
        grid_spec=pltpu.PrefetchScalarGridSpec(
            num_scalar_prefetch=1,
            grid=grid,
            in_specs=[param_spec, param_spec],
            out_specs=out_spec,
        ),
        compiler_params=_COMPILER_PARAMS,
    )(jnp.asarray([seed], dtype=jnp.int32), mu2d, logsigma2d)


def _call_external_noise(mu2d, logsigma2d, batch_size, seed, out_dtype, tb):
    feat = mu2d.shape[-1]
    grid = (pl.cdiv(batch_size, tb),)
    noise = jax.random.normal(jax.random.PRNGKey(seed), (batch_size, feat), jnp.float32)
    param_spec = pl.BlockSpec((1, feat), lambda b: (0, 0))
    batch_spec = pl.BlockSpec((tb, feat), lambda b: (b, 0))
    return pl.pallas_call(
        _noise_kernel,
        out_shape=jax.ShapeDtypeStruct((batch_size, feat), out_dtype),
        grid_spec=pl.GridSpec(
            grid=grid,
            in_specs=[param_spec, param_spec, batch_spec],
            out_specs=batch_spec,
        ),
        compiler_params=_COMPILER_PARAMS,
    )(mu2d, logsigma2d, noise)


def slotwise_learnt_conditioning(slots_mu, slots_logsigma, batch_size, seed=0,
                                 *, out_dtype=None):
    """Forward pass: returns (batch_size, n_slots, object_dim) conditioning vectors.

    slots_mu, slots_logsigma: (1, n_slots, object_dim) learnt parameters.
    """
    _, n_slots, object_dim = slots_mu.shape
    feat = n_slots * object_dim
    if out_dtype is None:
        out_dtype = slots_mu.dtype

    # Lane-dense flatten (layout plumbing only; reshapes are free here).
    mu2d = slots_mu.reshape(1, feat)
    logsigma2d = slots_logsigma.reshape(1, feat)
    tb = _block_rows(batch_size, feat)

    if hasattr(pltpu, "stateful_normal") and hasattr(pltpu, "prng_seed"):
        try:
            out2d = _call_internal_rng(mu2d, logsigma2d, batch_size, seed, out_dtype, tb)
        except Exception:
            # TODO(synk): stateful TPU PRNG unavailable/mismatched in this JAX
            # build; fall back to a wrapper-generated HBM noise operand.
            out2d = _call_external_noise(mu2d, logsigma2d, batch_size, seed, out_dtype, tb)
    else:
        out2d = _call_external_noise(mu2d, logsigma2d, batch_size, seed, out_dtype, tb)

    return out2d.reshape(batch_size, n_slots, object_dim)


def _xavier_uniform(key, shape, dtype=jnp.float32):
    # torch.nn.init.xavier_uniform_ on a (1, n_slots, D) tensor:
    # fan_in = D, fan_out = n_slots, gain = 1.
    fan_in, fan_out = shape[-1], shape[-2]
    limit = (6.0 / (fan_in + fan_out)) ** 0.5
    return jax.random.uniform(key, shape, dtype, minval=-limit, maxval=limit)


if __name__ == "__main__":
    n_slots = 8
    object_dim = 32
    batch_size = 2

    key = jax.random.PRNGKey(0)
    k_mu, k_logsigma = jax.random.split(key, 2)

    # Deterministic parameter init mirroring the module's __init__:
    #   slots_mu       <- normal_ (std=1)
    #   slots_logsigma <- xavier_uniform_
    slots_mu = jax.random.normal(k_mu, (1, n_slots, object_dim), jnp.float32)
    slots_logsigma = _xavier_uniform(k_logsigma, (1, n_slots, object_dim))

    out = slotwise_learnt_conditioning(slots_mu, slots_logsigma, batch_size, seed=0)
    out = jax.block_until_ready(out)
    assert out.shape == (batch_size, n_slots, object_dim)
    assert bool(jnp.all(jnp.isfinite(out)))

    # Determinism: same seed -> identical draw.
    out_again = jax.block_until_ready(
        slotwise_learnt_conditioning(slots_mu, slots_logsigma, batch_size, seed=0))
    assert bool(jnp.array_equal(out, out_again))

    # Structural check: sigma -> 0  =>  out == mu broadcast over the batch.
    tiny_logsigma = jnp.full_like(slots_logsigma, -100.0)
    out_mu = jax.block_until_ready(
        slotwise_learnt_conditioning(slots_mu, tiny_logsigma, batch_size, seed=3))
    assert bool(jnp.allclose(out_mu, jnp.broadcast_to(slots_mu, out_mu.shape),
                             atol=1e-5, rtol=1e-5))

    # Statistical check: z = (out - mu) / sigma ~ N(0, 1) (512 samples, loose bounds).
    z = (out - slots_mu) / jnp.exp(slots_logsigma)
    z_mean = float(jnp.mean(z))
    z_std = float(jnp.std(z))
    assert abs(z_mean) < 0.35, z_mean
    assert 0.7 < z_std < 1.3, z_std

    print("KERNEL_OK")
</pallas_src>

<mosaic_0001>
module attributes {stable_mosaic.version = 11 : i64} {
  func.func @_rng_kernel(%arg0: i32, %arg1: memref<1xi32, #tpu.memory_space<smem>>, %arg2: memref<1x256xf32, #tpu.memory_space<vmem>>, %arg3: memref<1x256xf32, #tpu.memory_space<vmem>>, %arg4: memref<2x256xf32, #tpu.memory_space<vmem>>) attributes {dimension_semantics = [#tpu.dimension_semantics<parallel>], iteration_bounds = array<i64: 1>, scalar_prefetch = 1 : i64, scratch_operands = 0 : i64, tpu.core_type = #tpu.core_type<tc>, window_params = [{pipeline_mode = #tpu.pipeline_mode<synchronous>, transform_indices = @transform_0, window_bounds = array<i64: 1, 256>}, {pipeline_mode = #tpu.pipeline_mode<synchronous>, transform_indices = @transform_1, window_bounds = array<i64: 1, 256>}, {transform_indices = @transform_2, window_bounds = array<i64: 2, 256>}]} {
    %c0 = arith.constant 0 : index
    %0 = memref.load %arg1[%c0] : memref<1xi32, #tpu.memory_space<smem>>
    %1 = arith.addi %0, %arg0 : i32
    "tpu.prng_set_seed_32"(%1) : (i32) -> ()
    %c0_i32 = arith.constant 0 : i32
    %c0_i32_0 = arith.constant 0 : i32
    %cst = arith.constant -0.99999994 : f32
    %cst_1 = arith.constant 1.000000e+00 : f32
    %2 = vector.broadcast %cst : f32 to vector<1x1xf32>
    %3 = vector.broadcast %cst_1 : f32 to vector<1x1xf32>
    %4 = "tpu.prng_random_bits"() : () -> vector<2x256xi32>
    %c9_i32 = arith.constant 9 : i32
    %5 = vector.broadcast %c9_i32 : i32 to vector<2x256xi32>
    %6 = arith.shrui %4, %5 : vector<2x256xi32>
    %c1065353216_i32 = arith.constant 1065353216 : i32
    %7 = vector.broadcast %c1065353216_i32 : i32 to vector<2x256xi32>
    %8 = arith.ori %6, %7 : vector<2x256xi32>
    %9 = tpu.bitcast %8 : vector<2x256xi32> -> vector<2x256xf32>
    %cst_2 = arith.constant 1.000000e+00 : f32
    %10 = vector.broadcast %cst_2 : f32 to vector<2x256xf32>
    %11 = arith.subf %9, %10 : vector<2x256xf32>
    %12 = arith.subf %3, %2 : vector<1x1xf32>
    %13 = vector.broadcast %12 : vector<1x1xf32> to vector<2x256xf32>
    %14 = arith.mulf %11, %13 : vector<2x256xf32>
    %15 = vector.broadcast %2 : vector<1x1xf32> to vector<2x256xf32>
    %16 = arith.addf %14, %15 : vector<2x256xf32>
    %17 = vector.broadcast %2 : vector<1x1xf32> to vector<2x256xf32>
    %18 = arith.maximumf %17, %16 : vector<2x256xf32>
    %cst_3 = arith.constant 0.000000e+00 : f32
    %19 = vector.broadcast %cst_3 : f32 to vector<2x256xf32>
    %20 = arith.subf %19, %18 : vector<2x256xf32>
    %21 = arith.mulf %18, %20 : vector<2x256xf32>
    %22 = math.log1p %21 : vector<2x256xf32>
    %cst_4 = arith.constant 0.000000e+00 : f32
    %23 = vector.broadcast %cst_4 : f32 to vector<2x256xf32>
    %24 = arith.subf %23, %22 : vector<2x256xf32>
    %cst_5 = arith.constant 5.000000e+00 : f32
    %25 = vector.broadcast %cst_5 : f32 to vector<2x256xf32>
    %26 = arith.cmpf olt, %24, %25 : vector<2x256xf32>
    %cst_6 = arith.constant 2.500000e+00 : f32
    %27 = vector.broadcast %cst_6 : f32 to vector<2x256xf32>
    %28 = arith.subf %24, %27 : vector<2x256xf32>
    %29 = math.sqrt %24 : vector<2x256xf32>
    %cst_7 = arith.constant 3.000000e+00 : f32
    %30 = vector.broadcast %cst_7 : f32 to vector<2x256xf32>
    %31 = arith.subf %29, %30 : vector<2x256xf32>
    %32 = arith.select %26, %28, %31 : vector<2x256xi1>, vector<2x256xf32>
    %cst_8 = arith.constant 2.81022636E-8 : f32
    %cst_9 = arith.constant -2.00214257E-4 : f32
    %33 = vector.broadcast %cst_8 : f32 to vector<2x256xf32>
    %34 = vector.broadcast %cst_9 : f32 to vector<2x256xf32>
    %35 = arith.select %26, %33, %34 : vector<2x256xi1>, vector<2x256xf32>
    %cst_10 = arith.constant 3.43273939E-7 : f32
    %cst_11 = arith.constant 1.00950558E-4 : f32
    %36 = vector.broadcast %cst_10 : f32 to vector<2x256xf32>
    %37 = vector.broadcast %cst_11 : f32 to vector<2x256xf32>
    %38 = arith.select %26, %36, %37 : vector<2x256xi1>, vector<2x256xf32>
    %39 = arith.mulf %35, %32 : vector<2x256xf32>
    %40 = arith.addf %38, %39 : vector<2x256xf32>
    %cst_12 = arith.constant -3.5233877E-6 : f32
    %cst_13 = arith.constant 0.00134934322 : f32
    %41 = vector.broadcast %cst_12 : f32 to vector<2x256xf32>
    %42 = vector.broadcast %cst_13 : f32 to vector<2x256xf32>
    %43 = arith.select %26, %41, %42 : vector<2x256xi1>, vector<2x256xf32>
    %44 = arith.mulf %40, %32 : vector<2x256xf32>
    %45 = arith.addf %43, %44 : vector<2x256xf32>
    %cst_14 = arith.constant -4.39150654E-6 : f32
    %cst_15 = arith.constant -0.00367342844 : f32
    %46 = vector.broadcast %cst_14 : f32 to vector<2x256xf32>
    %47 = vector.broadcast %cst_15 : f32 to vector<2x256xf32>
    %48 = arith.select %26, %46, %47 : vector<2x256xi1>, vector<2x256xf32>
    %49 = arith.mulf %45, %32 : vector<2x256xf32>
    %50 = arith.addf %48, %49 : vector<2x256xf32>
    %cst_16 = arith.constant 2.1858087E-4 : f32
    %cst_17 = arith.constant 0.00573950773 : f32
    %51 = vector.broadcast %cst_16 : f32 to vector<2x256xf32>
    %52 = vector.broadcast %cst_17 : f32 to vector<2x256xf32>
    %53 = arith.select %26, %51, %52 : vector<2x256xi1>, vector<2x256xf32>
    %54 = arith.mulf %50, %32 : vector<2x256xf32>
    %55 = arith.addf %53, %54 : vector<2x256xf32>
    %cst_18 = arith.constant -0.00125372503 : f32
    %cst_19 = arith.constant -0.0076224613 : f32
    %56 = vector.broadcast %cst_18 : f32 to vector<2x256xf32>
    %57 = vector.broadcast %cst_19 : f32 to vector<2x256xf32>
    %58 = arith.select %26, %56, %57 : vector<2x256xi1>, vector<2x256xf32>
    %59 = arith.mulf %55, %32 : vector<2x256xf32>
    %60 = arith.addf %58, %59 : vector<2x256xf32>
    %cst_20 = arith.constant -0.00417768164 : f32
    %cst_21 = arith.constant 0.00943887047 : f32
    %61 = vector.broadcast %cst_20 : f32 to vector<2x256xf32>
    %62 = vector.broadcast %cst_21 : f32 to vector<2x256xf32>
    %63 = arith.select %26, %61, %62 : vector<2x256xi1>, vector<2x256xf32>
    %64 = arith.mulf %60, %32 : vector<2x256xf32>
    %65 = arith.addf %63, %64 : vector<2x256xf32>
    %cst_22 = arith.constant 0.246640727 : f32
    %cst_23 = arith.constant 1.00167406 : f32
    %66 = vector.broadcast %cst_22 : f32 to vector<2x256xf32>
    %67 = vector.broadcast %cst_23 : f32 to vector<2x256xf32>
    %68 = arith.select %26, %66, %67 : vector<2x256xi1>, vector<2x256xf32>
    %69 = arith.mulf %65, %32 : vector<2x256xf32>
    %70 = arith.addf %68, %69 : vector<2x256xf32>
    %cst_24 = arith.constant 1.50140941 : f32
    %cst_25 = arith.constant 2.83297682 : f32
    %71 = vector.broadcast %cst_24 : f32 to vector<2x256xf32>
    %72 = vector.broadcast %cst_25 : f32 to vector<2x256xf32>
    %73 = arith.select %26, %71, %72 : vector<2x256xi1>, vector<2x256xf32>
    %74 = arith.mulf %70, %32 : vector<2x256xf32>
    %75 = arith.addf %73, %74 : vector<2x256xf32>
    %76 = math.absf %18 : vector<2x256xf32>
    %cst_26 = arith.constant 1.000000e+00 : f32
    %77 = vector.broadcast %cst_26 : f32 to vector<2x256xf32>
    %78 = arith.cmpf oeq, %76, %77 : vector<2x256xf32>
    %cst_27 = arith.constant 0x7F800000 : f32
    %79 = vector.broadcast %cst_27 : f32 to vector<2x256xf32>
    %80 = arith.mulf %79, %18 : vector<2x256xf32>
    %81 = arith.mulf %75, %18 : vector<2x256xf32>
    %82 = arith.select %78, %80, %81 : vector<2x256xi1>, vector<2x256xf32>
    %cst_28 = arith.constant 1.41421354 : f32
    %83 = vector.broadcast %cst_28 : f32 to vector<2x256xf32>
    %84 = arith.mulf %83, %82 : vector<2x256xf32>
    %c0_29 = arith.constant 0 : index
    %c0_30 = arith.constant 0 : index
    %85 = vector.load %arg2[%c0_29, %c0_30] : memref<1x256xf32, #tpu.memory_space<vmem>>, vector<1x256xf32>
    %c0_31 = arith.constant 0 : index
    %c0_32 = arith.constant 0 : index
    %86 = vector.load %arg3[%c0_31, %c0_32] : memref<1x256xf32, #tpu.memory_space<vmem>>, vector<1x256xf32>
    %87 = math.exp %86 : vector<1x256xf32>
    %88 = vector.broadcast %87 : vector<1x256xf32> to vector<2x256xf32>
    %89 = arith.mulf %88, %84 : vector<2x256xf32>
    %90 = vector.broadcast %85 : vector<1x256xf32> to vector<2x256xf32>
    %91 = arith.addf %90, %89 : vector<2x256xf32>
    %c0_33 = arith.constant 0 : index
    %c0_34 = arith.constant 0 : index
    %92 = vector.load %arg4[%c0_33, %c0_34] : memref<2x256xf32, #tpu.memory_space<vmem>>, vector<2x256xf32>
    tpu.vector_store %arg4[%c0_33, %c0_34], %91 {strides = array<i32>} : memref<2x256xf32, #tpu.memory_space<vmem>>, vector<2x256xf32>,
    return
  }
  func.func @transform_0(%arg0: i32, %arg1: memref<1xi32, #tpu.memory_space<smem>>) -> (i32, i32) {
    %c0_i32 = arith.constant 0 : i32
    %c0_i32_0 = arith.constant 0 : i32
    %c0_i32_1 = arith.constant 0 : i32
    return %c0_i32, %c0_i32_0 : i32, i32
  }
  func.func @transform_1(%arg0: i32, %arg1: memref<1xi32, #tpu.memory_space<smem>>) -> (i32, i32) {
    %c0_i32 = arith.constant 0 : i32
    %c0_i32_0 = arith.constant 0 : i32
    %c0_i32_1 = arith.constant 0 : i32
    return %c0_i32, %c0_i32_0 : i32, i32
  }
  func.func @transform_2(%arg0: i32, %arg1: memref<1xi32, #tpu.memory_space<smem>>) -> (i32, i32) {
    %c0_i32 = arith.constant 0 : i32
    %c0_i32_0 = arith.constant 0 : i32
    return %arg0, %c0_i32 : i32, i32
  }
}

module attributes {stable_mosaic.version = 11 : i64} {
  func.func @_noise_kernel(%arg0: i32, %arg1: memref<1x256xf32, #tpu.memory_space<vmem>>, %arg2: memref<1x256xf32, #tpu.memory_space<vmem>>, %arg3: memref<2x256xf32, #tpu.memory_space<vmem>>, %arg4: memref<2x256xf32, #tpu.memory_space<vmem>>) attributes {dimension_semantics = [#tpu.dimension_semantics<parallel>], iteration_bounds = array<i64: 1>, scalar_prefetch = 0 : i64, scratch_operands = 0 : i64, tpu.core_type = #tpu.core_type<tc>, window_params = [{pipeline_mode = #tpu.pipeline_mode<synchronous>, transform_indices = @transform_0, window_bounds = array<i64: 1, 256>}, {pipeline_mode = #tpu.pipeline_mode<synchronous>, transform_indices = @transform_1, window_bounds = array<i64: 1, 256>}, {transform_indices = @transform_2, window_bounds = array<i64: 2, 256>}, {transform_indices = @transform_3, window_bounds = array<i64: 2, 256>}]} {
    %c0 = arith.constant 0 : index
    %c0_0 = arith.constant 0 : index
    %0 = vector.load %arg1[%c0, %c0_0] : memref<1x256xf32, #tpu.memory_space<vmem>>, vector<1x256xf32>
    %c0_1 = arith.constant 0 : index
    %c0_2 = arith.constant 0 : index
    %1 = vector.load %arg2[%c0_1, %c0_2] : memref<1x256xf32, #tpu.memory_space<vmem>>, vector<1x256xf32>
    %2 = math.exp %1 : vector<1x256xf32>
    %c0_3 = arith.constant 0 : index
    %c0_4 = arith.constant 0 : index
    %3 = vector.load %arg3[%c0_3, %c0_4] : memref<2x256xf32, #tpu.memory_space<vmem>>, vector<2x256xf32>
    %4 = vector.broadcast %2 : vector<1x256xf32> to vector<2x256xf32>
    %5 = arith.mulf %4, %3 : vector<2x256xf32>
    %6 = vector.broadcast %0 : vector<1x256xf32> to vector<2x256xf32>
    %7 = arith.addf %6, %5 : vector<2x256xf32>
    %c0_5 = arith.constant 0 : index
    %c0_6 = arith.constant 0 : index
    %8 = vector.load %arg4[%c0_5, %c0_6] : memref<2x256xf32, #tpu.memory_space<vmem>>, vector<2x256xf32>
    tpu.vector_store %arg4[%c0_5, %c0_6], %7 {strides = array<i32>} : memref<2x256xf32, #tpu.memory_space<vmem>>, vector<2x256xf32>,
    return
  }
  func.func @transform_0(%arg0: i32) -> (i32, i32) {
    %c0_i32 = arith.constant 0 : i32
    %c0_i32_0 = arith.constant 0 : i32
    %c0_i32_1 = arith.constant 0 : i32
    return %c0_i32, %c0_i32_0 : i32, i32
  }
  func.func @transform_1(%arg0: i32) -> (i32, i32) {
    %c0_i32 = arith.constant 0 : i32
    %c0_i32_0 = arith.constant 0 : i32
    %c0_i32_1 = arith.constant 0 : i32
    return %c0_i32, %c0_i32_0 : i32, i32
  }
  func.func @transform_2(%arg0: i32) -> (i32, i32) {
    %c0_i32 = arith.constant 0 : i32
    %c0_i32_0 = arith.constant 0 : i32
    return %arg0, %c0_i32 : i32, i32
  }
  func.func @transform_3(%arg0: i32) -> (i32, i32) {
    %c0_i32 = arith.constant 0 : i32
    %c0_i32_0 = arith.constant 0 : i32
    return %arg0, %c0_i32 : i32, i32
  }
}

</mosaic_0001>

<llo_original>
// kernel: tpu_custom_call.1
$region0: #{tpu_custom_call.1}
  #allocation0 [shape = 'u32[]', space=smem, size = 0x4, offset = 0x4, fixed_abs, tag = 'smem constant byte address 0x4 - core index']
  #allocation1 [shape = 'u32[144,128]{1,0:T(1,128)}', space=vmem, size = 0x12000, scoped, tag = 'internal scratch']
  #allocation2 [shape = 's32[1]{0}', space=sflag, size = 0x4, scoped, tag = 'scoped memory for tpu_custom_call.1']
  #allocation3 [shape = 's32[1]{0:T(128)S(6)}', space=smem, size = 0x200, scoped, tag = 'prefetched SMEM operand 0']
  %s0 = inlined_call_operand.<no memory space> [shape: s32[1], index: 0, kind: input, shape index: {}]
  %s1 = inlined_call_operand.vmem [shape: f32[1,256], index: 1, kind: input, shape index: {}]
  %s2 = inlined_call_operand.vmem [shape: f32[1,256], index: 2, kind: input, shape index: {}]
  %s3 = inlined_call_operand.hbm [shape: f32[2,256], index: 3, kind: output, shape index: {}]
  %s4 = sld [smem:[#allocation0]]
  $region18: #{tpu_custom_call.1} parent=0
    _
  %s6 = ssub.s32 1, %s4
  %s7 = scalar_select 0, %s6, %s4
  %8 = sst [smem:[#allocation3]] %s0
  $region1: #{tpu_custom_call.1} parent=0
    #allocation4 [shape = 'u8[2048]{0}', space=vmem, size = 0x800, scoped, tag = 'output window, operand 0, single buffered']
    #allocation5 [shape = 's32[1]{0}', space=sflag, size = 0x4, scoped, tag = 'scoped memory for tpu_custom_call.1']
    %9 = vsyncpa [#allocation5], 0
    // Predicated region
    $region2: #{tpu_custom_call.1} parent=1 // pred_check
      _
    $region3: #{tpu_custom_call.1} parent=1 // pred_check_branch
      %11 = sbr.rel (0) target = $region5
    $region4: #{tpu_custom_call.1} parent=1 // pred_region
      _
    $region5: #{tpu_custom_call.1} parent=1 // pred_fallthru
      _
    // Predicated region
    $region6: #{tpu_custom_call.1} parent=1 // pred_check
      _
    $region7: #{tpu_custom_call.1} parent=1 // pred_check_branch
      %13 = sbr.rel (0) target = $region9
    $region8: #{tpu_custom_call.1} parent=1 // pred_region
      _
    $region9: #{tpu_custom_call.1} parent=1 // pred_fallthru
      _
    %s14 = sld [smem:[#allocation3]]
    %s15 = sadd.s32 %s14, 0
    %v16 = vlaneseq
    %v17 = vstv %s15
    %v18 = vxor.u32 %v17, %v17
    %v19 = vxor.u32 %v18, 466688986
    %v20 = vadd.s32 %v16, %v17
    %v21 = vadd.s32 %v20, %v20
    %v22 = vshll.u32 %v20, 13
    %v23 = vshrl.u32 %v20, 19
    %v24 = vor.u32 %v22, %v23
    %v25 = vxor.u32 %v21, %v24
    %v26 = vadd.s32 %v21, %v25
    %v27 = vshll.u32 %v25, 15
    %v28 = vshrl.u32 %v25, 17
    %v29 = vor.u32 %v27, %v28
    %v30 = vxor.u32 %v26, %v29
    %v31 = vadd.s32 %v26, %v30
    %v32 = vshll.u32 %v30, 26
    %v33 = vshrl.u32 %v30, 6
    %v34 = vor.u32 %v32, %v33
    %v35 = vxor.u32 %v31, %v34
    %v36 = vadd.s32 %v31, %v35
    %v37 = vshll.u32 %v35, 6
    %v38 = vshrl.u32 %v35, 26
    %v39 = vor.u32 %v37, %v38
    %v40 = vxor.u32 %v36, %v39
    %v41 = vadd.s32 %v36, %v17
    %v42 = vadd.s32 %v40, %v19
    %v43 = vadd.s32 %v42, 1
    %v44 = vadd.s32 %v41, %v43
    %v45 = vshll.u32 %v43, 17
    %v46 = vshrl.u32 %v43, 15
    %v47 = vor.u32 %v45, %v46
    %v48 = vxor.u32 %v44, %v47
    %v49 = vadd.s32 %v44, %v48
    %v50 = vshll.u32 %v48, 29
    %v51 = vshrl.u32 %v48, 3
    %v52 = vor.u32 %v50, %v51
    %v53 = vxor.u32 %v49, %v52
    %v54 = vadd.s32 %v49, %v53
    %v55 = vshll.u32 %v53, 16
    %v56 = vshrl.u32 %v53, 16
    %v57 = vor.u32 %v55, %v56
    %v58 = vxor.u32 %v54, %v57
    %v59 = vadd.s32 %v54, %v58
    %v60 = vshll.u32 %v58, 24
    %v61 = vshrl.u32 %v58, 8
    %v62 = vor.u32 %v60, %v61
    %v63 = vxor.u32 %v59, %v62
    %v64 = vadd.s32 %v59, %v19
    %v65 = vadd.s32 %v63, %v17
    %v66 = vadd.s32 %v65, 2
    %v67 = vadd.s32 %v64, %v66
    %v68 = vshll.u32 %v66, 13
    %v69 = vshrl.u32 %v66, 19
    %v70 = vor.u32 %v68, %v69
    %v71 = vxor.u32 %v67, %v70
    %v72 = vadd.s32 %v67, %v71
    %v73 = vshll.u32 %v71, 15
    %v74 = vshrl.u32 %v71, 17
    %v75 = vor.u32 %v73, %v74
    %v76 = vxor.u32 %v72, %v75
    %v77 = vadd.s32 %v72, %v76
    %v78 = vshll.u32 %v76, 26
    %v79 = vshrl.u32 %v76, 6
    %v80 = vor.u32 %v78, %v79
    %v81 = vxor.u32 %v77, %v80
    %v82 = vadd.s32 %v77, %v81
    %v83 = vshll.u32 %v81, 6
    %v84 = vshrl.u32 %v81, 26
    %v85 = vor.u32 %v83, %v84
    %v86 = vxor.u32 %v82, %v85
    %v87 = vadd.s32 %v82, %v17
    %v88 = vadd.s32 %v86, %v17
    %v89 = vadd.s32 %v88, 3
    %v90 = vadd.s32 %v87, %v89
    %v91 = vshll.u32 %v89, 17
    %v92 = vshrl.u32 %v89, 15
    %v93 = vor.u32 %v91, %v92
    %v94 = vxor.u32 %v90, %v93
    %v95 = vadd.s32 %v90, %v94
    %v96 = vshll.u32 %v94, 29
    %v97 = vshrl.u32 %v94, 3
    %v98 = vor.u32 %v96, %v97
    %v99 = vxor.u32 %v95, %v98
    %v100 = vadd.s32 %v95, %v99
    %v101 = vshll.u32 %v99, 16
    %v102 = vshrl.u32 %v99, 16
    %v103 = vor.u32 %v101, %v102
    %v104 = vxor.u32 %v100, %v103
    %v105 = vadd.s32 %v100, %v104
    %v106 = vshll.u32 %v104, 24
    %v107 = vshrl.u32 %v104, 8
    %v108 = vor.u32 %v106, %v107
    %v109 = vxor.u32 %v105, %v108
    %v110 = vadd.s32 %v105, %v17
    %v111 = vadd.s32 %v109, %v19
    %v112 = vadd.s32 %v111, 4
    %v113 = vadd.s32 %v110, %v112
    %v114 = vshll.u32 %v112, 13
    %v115 = vshrl.u32 %v112, 19
    %v116 = vor.u32 %v114, %v115
    %v117 = vxor.u32 %v113, %v116
    %v118 = vadd.s32 %v113, %v117
    %v119 = vshll.u32 %v117, 15
    %v120 = vshrl.u32 %v117, 17
    %v121 = vor.u32 %v119, %v120
    %v122 = vxor.u32 %v118, %v121
    %v123 = vadd.s32 %v118, %v122
    %v124 = vshll.u32 %v122, 26
    %v125 = vshrl.u32 %v122, 6
    %v126 = vor.u32 %v124, %v125
    %v127 = vxor.u32 %v123, %v126
    %v128 = vadd.s32 %v123, %v127
    %v129 = vshll.u32 %v127, 6
    %v130 = vshrl.u32 %v127, 26
    %v131 = vor.u32 %v129, %v130
    %v132 = vxor.u32 %v128, %v131
    %v133 = vadd.s32 %v128, %v19
    %v134 = vadd.s32 %v132, %v17
    %v135 = vadd.s32 %v134, 5
    %v136 = vxor.u32 %v133, %v135
    %137 = set.rngseed %v136
    %v138 = vrng
    %v139 = vrng
    %v140 = vshrl.u32 %v138, 9
    %v141 = vshrl.u32 %v139, 9
    %v142 = vor.u32 %v140, 1065353216
    %v143 = vor.u32 %v141, 1065353216
    %v146 = vsub.f32 %v142, 1.0
    %v147 = vsub.f32 %v143, 1.0
    %v148 = vmul.f32 %v146, 2.0
    %v149 = vmul.f32 %v147, 2.0
    %v150 = vadd.f32 %v148, -0.99999994
    %v151 = vadd.f32 %v149, -0.99999994
    %v152 = vmax.f32 %v150, -0.99999994
    %v153 = vmax.f32 %v151, -0.99999994
    %v154 = vsub.f32 0.0, %v152
    %v155 = vsub.f32 0.0, %v153
    %v156 = vmul.f32 %v152, %v154
    %v157 = vmul.f32 %v153, %v155
    %v158 = vadd.f32 %v156, 1.0
    %v159 = vlog2.pop %v158
    %v160 = vmul.f32 %v159, 0.6931472
    %v161 = vmul.f32 -0.5, %v156
    %v162 = vadd.f32 %v161, 1.0
    %v163 = vmul.f32 %v162, %v156
    %v164 = vand.u32 2147483647, %v156
    %vm165 = vcmp.lt.f32.partialorder %v164, 0.0004427343
    %v166 = vsel %vm165, %v163, %v160
    %v167 = vadd.f32 %v157, 1.0
    %v168 = vlog2.pop %v167
    %v169 = vmul.f32 %v168, 0.6931472
    %v170 = vmul.f32 -0.5, %v157
    %v171 = vadd.f32 %v170, 1.0
    %v172 = vmul.f32 %v171, %v157
    %v173 = vand.u32 2147483647, %v157
    %vm174 = vcmp.lt.f32.partialorder %v173, 0.0004427343
    %v175 = vsel %vm174, %v172, %v169
    %v176 = vsub.f32 0.0, %v166
    %v177 = vsub.f32 0.0, %v175
    %vm178 = vcmp.lt.f32.partialorder %v176, 5.0
    %vm179 = vcmp.lt.f32.partialorder %v177, 5.0
    %v180 = vsub.f32 %v176, 2.5
    %v181 = vsub.f32 %v177, 2.5
    %v182 = vrsqrt.pop %v176
    %v183 = vmul.f32 %v176, %v182
    %vm184 = vcmp.eq.f32.partialorder %v176, inf
    %v185 = vsel %vm184, %v176, %v183
    %vm186 = vcmp.eq.f32.partialorder %v176, 0.0
    %v187 = vand.u32 %v176, 2147483648
    %v188 = vsel %vm186, %v187, %v185
    %v189 = vrsqrt.pop %v177
    %v190 = vmul.f32 %v177, %v189
    %vm191 = vcmp.eq.f32.partialorder %v177, inf
    %v192 = vsel %vm191, %v177, %v190
    %vm193 = vcmp.eq.f32.partialorder %v177, 0.0
    %v194 = vand.u32 %v177, 2147483648
    %v195 = vsel %vm193, %v194, %v192
    %v196 = vsub.f32 %v188, 3.0
    %v197 = vsub.f32 %v195, 3.0
    %v198 = vsel %vm178, %v180, %v196
    %v199 = vsel %vm179, %v181, %v197
    %v200 = vsel %vm178, 2.8102264e-08, -0.00020021426
    %v201 = vsel %vm179, 2.8102264e-08, -0.00020021426
    %v202 = vsel %vm178, 3.4327394e-07, 0.00010095056
    %v203 = vsel %vm179, 3.4327394e-07, 0.00010095056
    %v204 = vmul.f32 %v200, %v198
    %v205 = vmul.f32 %v201, %v199
    %v206 = vadd.f32 %v202, %v204
    %v207 = vadd.f32 %v203, %v205
    %v208 = vsel %vm178, -3.5233877e-06, 0.0013493432
    %v209 = vsel %vm179, -3.5233877e-06, 0.0013493432
    %v210 = vmul.f32 %v206, %v198
    %v211 = vmul.f32 %v207, %v199
    %v212 = vadd.f32 %v208, %v210
    %v213 = vadd.f32 %v209, %v211
    %v214 = vsel %vm178, -4.3915065e-06, -0.0036734284
    %v215 = vsel %vm179, -4.3915065e-06, -0.0036734284
    %v216 = vmul.f32 %v212, %v198
    %v217 = vmul.f32 %v213, %v199
    %v218 = vadd.f32 %v214, %v216
    %v219 = vadd.f32 %v215, %v217
    %v220 = vsel %vm178, 0.00021858087, 0.0057395077
    %v221 = vsel %vm179, 0.00021858087, 0.0057395077
    %v222 = vmul.f32 %v218, %v198
    %v223 = vmul.f32 %v219, %v199
    %v224 = vadd.f32 %v220, %v222
    %v225 = vadd.f32 %v221, %v223
    %v226 = vsel %vm178, -0.001253725, -0.0076224613
    %v227 = vsel %vm179, -0.001253725, -0.0076224613
    %v228 = vmul.f32 %v224, %v198
    %v229 = vmul.f32 %v225, %v199
    %v230 = vadd.f32 %v226, %v228
    %v231 = vadd.f32 %v227, %v229
    %v232 = vsel %vm178, -0.0041776816, 0.0094388705
    %v233 = vsel %vm179, -0.0041776816, 0.0094388705
    %v234 = vmul.f32 %v230, %v198
    %v235 = vmul.f32 %v231, %v199
    %v236 = vadd.f32 %v232, %v234
    %v237 = vadd.f32 %v233, %v235
    %v238 = vsel %vm178, 0.24664073, 1.001674
    %v239 = vsel %vm179, 0.24664073, 1.001674
    %v240 = vmul.f32 %v236, %v198
    %v241 = vmul.f32 %v237, %v199
    %v242 = vadd.f32 %v238, %v240
    %v243 = vadd.f32 %v239, %v241
    %v244 = vsel %vm178, 1.5014094, 2.8329768
    %v245 = vsel %vm179, 1.5014094, 2.8329768
    %v246 = vmul.f32 %v242, %v198
    %v247 = vmul.f32 %v243, %v199
    %v248 = vadd.f32 %v244, %v246
    %v249 = vadd.f32 %v245, %v247
    %v250 = vand.u32 2147483647, %v152
    %v251 = vand.u32 2147483647, %v153
    %vm252 = vcmp.eq.f32.partialorder %v250, 1.0
    %vm253 = vcmp.eq.f32.partialorder %v251, 1.0
    %v254 = vmul.f32 %v152, inf
    %v255 = vmul.f32 %v153, inf
    %v256 = vmul.f32 %v248, %v152
    %v257 = vmul.f32 %v249, %v153
    %v258 = vsel %vm252, %v254, %v256
    %v259 = vsel %vm253, %v255, %v257
    %v260 = vmul.f32 %v258, 1.4142135
    %v261 = vmul.f32 %v259, 1.4142135
    %v262 = vld [vmem:[%s1] sm:$0x3]
    %v263 = vld [vmem:[%s2] sm:$0x3]
    %v264 = vmul.f32 %v263, 1.442695
    %v265 = vpow.pop %v264
    %v267 = vlaneseq
    %v268 = vshrl.u32 %v267, 7
    %v269 = vsub.s32 0, %v268
    %v270 = vrot.slane %v265, %v269
    %v271 = vlaneseq
    %v272 = vshrl.u32 %v271, 7
    %v273 = vsub.s32 1, %v272
    %v274 = vrot.slane %v265, %v273
    %v277 = vmul.f32 %v270, %v260
    %v278 = vmul.f32 %v274, %v261
    %v280 = vlaneseq
    %v281 = vshrl.u32 %v280, 7
    %v282 = vsub.s32 0, %v281
    %v283 = vrot.slane %v262, %v282
    %v284 = vlaneseq
    %v285 = vshrl.u32 %v284, 7
    %v286 = vsub.s32 1, %v285
    %v287 = vrot.slane %v262, %v286
    %v290 = vadd.f32 %v283, %v277
    %v291 = vadd.f32 %v287, %v278
    %v294 = vcombine.low %v290, %v291
    %v296 = vunpack.c.l.s4 1983009808
    %v297 = vunpack.c.0.s8 %v296
    %v298 = vlaneseq
    %v299 = vshrl.u32 %v298, 7
    %v300 = vsub.s32 %v297, %v299
    %v301 = vrot.slane %v294, %v300
    %303 = vst [vmem:[#allocation4] sm:$0xf] %v301
    // Predicated region
    $region10: #{tpu_custom_call.1} parent=1 // pred_check
      _
    $region11: #{tpu_custom_call.1} parent=1 // pred_check_branch
      %305 = sbr.rel (0) target = $region13
    $region12: #{tpu_custom_call.1} parent=1 // pred_region
      %s307 = ssub.s32 64, 64
      %308 = vsyncadd [#allocation5], %s307
      %s310 = sshll.u32 [#allocation4], 4
      %s311 = int_to_ptr.vmem [resolvable:$true] %s310
      %313 = dma.vmem_to_hbm [thread:$0]  %s311, 64, %s3, [#allocation5]
    $region13: #{tpu_custom_call.1} parent=1 // pred_fallthru
      _
    // Predicated region
    $region14: #{tpu_custom_call.1} parent=1 // pred_check
      _
    $region15: #{tpu_custom_call.1} parent=1 // pred_check_branch
      %315 = sbr.rel (0) target = $region17
    $region16: #{tpu_custom_call.1} parent=1 // pred_region
      %316 = dma.done [#allocation5], 64
    $region17: #{tpu_custom_call.1} parent=1 // pred_fallthru
      _
    %317 = vsyncpa [#allocation5], 1

// kernel: tpu_custom_call.1
$region0: #{tpu_custom_call.1}
  #allocation0 [shape = 'u32[]', space=smem, size = 0x4, offset = 0x4, fixed_abs, tag = 'smem constant byte address 0x4 - core index']
  #allocation1 [shape = 'u32[144,128]{1,0:T(1,128)}', space=vmem, size = 0x12000, scoped, tag = 'internal scratch']
  %s0 = inlined_call_operand.hbm [shape: f32[1,256], index: 0, kind: input, shape index: {}]
  %s1 = inlined_call_operand.vmem [shape: f32[1,256], index: 1, kind: input, shape index: {}]
  %s2 = inlined_call_operand.vmem [shape: f32[2,256], index: 2, kind: input, shape index: {}]
  %s3 = inlined_call_operand.hbm [shape: f32[2,256], index: 3, kind: output, shape index: {}]
  %s4 = sld [smem:[#allocation0]]
  $region26: #{tpu_custom_call.1} parent=0
    _
  %s6 = ssub.s32 1, %s4
  %s7 = scalar_select 0, %s6, %s4
  $region1: #{tpu_custom_call.1} parent=0
    #allocation2 [shape = 'u8[1024]{0}', space=vmem, size = 0x400, scoped, tag = 'input window, operand 0, single buffered']
    #allocation3 [shape = 's32[1]{0}', space=sflag, size = 0x4, scoped, tag = 'scoped memory for tpu_custom_call.1']
    #allocation4 [shape = 's32[1]{0}', space=sflag, size = 0x4, scoped, tag = 'scoped memory for tpu_custom_call.1']
    #allocation5 [shape = 'u8[2048]{0}', space=vmem, size = 0x800, scoped, tag = 'output window, operand 0, single buffered']
    %8 = vsyncpa [#allocation3], 0
    %9 = vsyncpa [#allocation4], 0
    // Predicated region
    $region2: #{tpu_custom_call.1} parent=1 // pred_check
      _
    $region3: #{tpu_custom_call.1} parent=1 // pred_check_branch
      %11 = sbr.rel (0) target = $region5
    $region4: #{tpu_custom_call.1} parent=1 // pred_region
      %s13 = ssub.s32 32, 32
      %14 = vsyncadd [#allocation3], %s13
      %s16 = sshll.u32 [#allocation2], 4
      %s17 = int_to_ptr.vmem [resolvable:$true] %s16
      %19 = dma.hbm_to_vmem [thread:$0]  %s0, 32, %s17, [#allocation3]
    $region5: #{tpu_custom_call.1} parent=1 // pred_fallthru
      _
    // Predicated region
    $region6: #{tpu_custom_call.1} parent=1 // pred_check
      _
    $region7: #{tpu_custom_call.1} parent=1 // pred_check_branch
      %21 = sbr.rel (0) target = $region9
    $region8: #{tpu_custom_call.1} parent=1 // pred_region
      _
    $region9: #{tpu_custom_call.1} parent=1 // pred_fallthru
      _
    // Predicated region
    $region10: #{tpu_custom_call.1} parent=1 // pred_check
      _
    $region11: #{tpu_custom_call.1} parent=1 // pred_check_branch
      %23 = sbr.rel (0) target = $region13
    $region12: #{tpu_custom_call.1} parent=1 // pred_region
      _
    $region13: #{tpu_custom_call.1} parent=1 // pred_fallthru
      _
    // Predicated region
    $region14: #{tpu_custom_call.1} parent=1 // pred_check
      _
    $region15: #{tpu_custom_call.1} parent=1 // pred_check_branch
      %25 = sbr.rel (0) target = $region17
    $region16: #{tpu_custom_call.1} parent=1 // pred_region
      %26 = dma.done [#allocation3], 32
    $region17: #{tpu_custom_call.1} parent=1 // pred_fallthru
      _
    %v27 = vld [vmem:[#allocation2] sm:$0x3]
    %v28 = vld [vmem:[%s1] sm:$0x3]
    %v29 = vmul.f32 %v28, 1.442695
    %v30 = vpow.pop %v29
    %v31 = vld [vmem:[%s2] sm:$0xf]
    %v33 = vlaneseq
    %v34 = vshrl.u32 %v33, 7
    %v35 = vsub.s32 0, %v34
    %v36 = vrot.slane %v30, %v35
    %v37 = vlaneseq
    %v38 = vshrl.u32 %v37, 7
    %v39 = vsub.s32 1, %v38
    %v40 = vrot.slane %v30, %v39
    %v45 = vunpack.c.l.s4 1983009808
    %v46 = vunpack.c.0.s8 %v45
    %v47 = vlaneseq
    %v48 = vshrl.u32 %v47, 7
    %v49 = vsub.s32 %v46, %v48
    %v50 = vrot.slane %v31, %v49
    %v51 = vcombine.high %v50, %v50
    %v54 = vmul.f32 %v36, %v50
    %v55 = vmul.f32 %v40, %v51
    %v57 = vlaneseq
    %v58 = vshrl.u32 %v57, 7
    %v59 = vsub.s32 0, %v58
    %v60 = vrot.slane %v27, %v59
    %v61 = vlaneseq
    %v62 = vshrl.u32 %v61, 7
    %v63 = vsub.s32 1, %v62
    %v64 = vrot.slane %v27, %v63
    %v67 = vadd.f32 %v60, %v54
    %v68 = vadd.f32 %v64, %v55
    %v71 = vcombine.low %v67, %v68
    %v73 = vunpack.c.l.s4 1983009808
    %v74 = vunpack.c.0.s8 %v73
    %v75 = vlaneseq
    %v76 = vshrl.u32 %v75, 7
    %v77 = vsub.s32 %v74, %v76
    %v78 = vrot.slane %v71, %v77
    %80 = vst [vmem:[#allocation5] sm:$0xf] %v78
    // Predicated region
    $region18: #{tpu_custom_call.1} parent=1 // pred_check
      _
    $region19: #{tpu_custom_call.1} parent=1 // pred_check_branch
      %82 = sbr.rel (0) target = $region21
    $region20: #{tpu_custom_call.1} parent=1 // pred_region
      %s84 = ssub.s32 64, 64
      %85 = vsyncadd [#allocation4], %s84
      %s87 = sshll.u32 [#allocation5], 4
      %s88 = int_to_ptr.vmem [resolvable:$true] %s87
      %90 = dma.vmem_to_hbm [thread:$0]  %s88, 64, %s3, [#allocation4]
    $region21: #{tpu_custom_call.1} parent=1 // pred_fallthru
      _
    // Predicated region
    $region22: #{tpu_custom_call.1} parent=1 // pred_check
      _
    $region23: #{tpu_custom_call.1} parent=1 // pred_check_branch
      %92 = sbr.rel (0) target = $region25
    $region24: #{tpu_custom_call.1} parent=1 // pred_region
      %93 = dma.done [#allocation4], 64
    $region25: #{tpu_custom_call.1} parent=1 // pred_fallthru
      _
    %94 = vsyncpa [#allocation3], 1
    %95 = vsyncpa [#allocation4], 1

</llo_original>
